<compile_context>
chip_gen: v7x
topology: tpu7x:2x2x1
jax: 0.10.0
libtpu: 0.0.40
codegen_flags: <defaults>
</compile_context>

<pallas_src>
import functools

import jax
import jax.numpy as jnp
from jax.experimental import pallas as pl
from jax.experimental.pallas import tpu as pltpu


def _hyper_interaction_kernel(x_ref, wc_ref, bc_ref, ws_ref, bs_ref, o_ref, *,
                              inv_hw, inv_c):
    # x block: (TB, C, HW). Compute in f32 regardless of I/O dtype.
    x = x_ref[...].astype(jnp.float32)

    # ---- channel branch: AdaptiveAvgPool2d(1) -> HyperZZW(channels,1,global) -> sigmoid ----
    z_pool = jnp.sum(x, axis=-1, keepdims=True) * inv_hw           # (TB, C, 1)
    wc = wc_ref[...][None]                                         # (1, C, 1)
    bc = bc_ref[...][None]                                         # (1, C, 1)
    ch_w = jax.nn.sigmoid(z_pool * (wc * z_pool + bc))             # (TB, C, 1)

    # ---- spatial branch: mean over channels -> HyperZZW(1,1,global) -> sigmoid ----
    z_s = jnp.sum(x, axis=-2, keepdims=True) * inv_c               # (TB, 1, HW)
    ws = ws_ref[0, 0]                                              # SMEM scalar
    bs = bs_ref[0, 0]                                              # SMEM scalar
    sp_w = jax.nn.sigmoid(z_s * (ws * z_s + bs))                   # (TB, 1, HW)

    # ---- fused output: out = x * z_c * sp_w with z_c = x * ch_w ----
    # Chained multiply against x-shaped operands: at most one block-size f32
    # temporary is live at a time; ch_w * sp_w is never materialized.
    o = x * ch_w
    o = o * sp_w
    o = o * x
    o_ref[...] = o.astype(o_ref.dtype)


def _tpu_vmem_and_cores():
    """Best-effort (VMEM bytes, TensorCores/chip) query with a v7x-safe fallback."""
    vmem_cap = 64 << 20   # conservative: v7x per-TC VMEM
    num_cores = 2         # conservative: assume 2 TensorCores per chip
    try:
        info = pltpu.get_tpu_info()
        cap = getattr(info, "vmem_capacity_bytes", None) or getattr(info, "vmem_bytes", None)
        if cap:
            vmem_cap = int(cap)
        cores = getattr(info, "num_cores", None) or getattr(info, "tensorcores_per_chip", None)
        if cores:
            num_cores = int(cores)
        else:
            # Heuristic: 128 MiB parts (v5e/v6e) are single-TensorCore chips.
            num_cores = 2 if vmem_cap <= (64 << 20) else 1
    except Exception:
        pass
    return vmem_cap, num_cores


def _per_image_vmem_bytes(C, HW, itemsize):
    """Explicit per-step VMEM footprint per image:
    2x input block + 2x output block (double buffering, I/O dtype)
    + ~2 live block-size f32 temporaries during compute."""
    io = C * HW * itemsize
    f32_tmp = C * HW * 4
    return 4 * io + 2 * f32_tmp


def hyper_interaction(x_nchw, wc, bc, ws, bs):
    """x_nchw: (N, C, H, W). wc, bc: (C, 1). ws, bs: (1, 1). Returns (N, C, H, W)."""
    N, C, H, W = x_nchw.shape
    HW = H * W
    x = x_nchw.reshape(N, C, HW)
    itemsize = jnp.dtype(x.dtype).itemsize

    # ---- block sizing from explicit VMEM accounting ----
    vmem_cap, num_cores = _tpu_vmem_and_cores()
    vmem_budget = min(int(vmem_cap * 3 // 4), 96 << 20)   # ~48 MiB on v7x, ~96 MiB on v5e/v6e
    per_image = _per_image_vmem_bytes(C, HW, itemsize)

    tb = max(1, int(vmem_budget // per_image))
    tb = min(tb, N)
    desired_steps = 2 * num_cores                          # >=2 steps per TC hides DMA prologue
    if N >= desired_steps:
        tb = min(tb, pl.cdiv(N, desired_steps))
    elif N >= num_cores:
        tb = min(tb, pl.cdiv(N, num_cores))                # at least one step per TC
    grid = (pl.cdiv(N, tb),)

    vmem_limit = int(min(vmem_cap, max(tb * per_image + (8 << 20), 32 << 20)))

    wc = wc.reshape(C, 1).astype(jnp.float32)
    bc = bc.reshape(C, 1).astype(jnp.float32)
    ws = ws.reshape(1, 1).astype(jnp.float32)
    bs = bs.reshape(1, 1).astype(jnp.float32)

    cost = pl.CostEstimate(
        flops=6 * N * C * HW,
        transcendentals=N * (C + HW),
        bytes_accessed=2 * N * C * HW * itemsize,
    )

    out = pl.pallas_call(
        functools.partial(_hyper_interaction_kernel, inv_hw=1.0 / HW, inv_c=1.0 / C),
        out_shape=jax.ShapeDtypeStruct((N, C, HW), x.dtype),
        grid=grid,
        in_specs=[
            pl.BlockSpec((tb, C, HW), lambda n: (n, 0, 0)),        # x, TB images / step
            pl.BlockSpec((C, 1), lambda n: (0, 0)),                # channel HyperZZW weight (resident)
            pl.BlockSpec((C, 1), lambda n: (0, 0)),                # channel HyperZZW bias (resident)
            pl.BlockSpec(memory_space=pltpu.MemorySpace.SMEM),     # spatial HyperZZW weight (scalar)
            pl.BlockSpec(memory_space=pltpu.MemorySpace.SMEM),     # spatial HyperZZW bias (scalar)
        ],
        out_specs=pl.BlockSpec((tb, C, HW), lambda n: (n, 0, 0)),
        compiler_params=pltpu.CompilerParams(
            dimension_semantics=("parallel",),
            vmem_limit_bytes=vmem_limit,
        ),
        cost_estimate=cost,
    )(x, wc, bc, ws, bs)

    return out.reshape(N, C, H, W)


def hyper_interaction_reference(x, wc, bc, ws, bs):
    """Pure-JAX reference mirroring the PyTorch forward."""
    C = x.shape[1]
    x = x.astype(jnp.float32)
    wc4 = wc.reshape(1, C, 1, 1)
    bc4 = bc.reshape(1, C, 1, 1)
    # HyperChannelInteraction
    z_pool = jnp.mean(x, axis=(2, 3), keepdims=True)               # (N, C, 1, 1)
    ch_w = jax.nn.sigmoid(z_pool * (wc4 * z_pool + bc4))
    z_c = x * ch_w
    # spatial branch
    z_s = jnp.mean(x, axis=1, keepdims=True)                       # (N, 1, H, W)
    sp_w = jax.nn.sigmoid(z_s * (ws[0, 0] * z_s + bs[0, 0]))
    return x * z_c * sp_w


if __name__ == "__main__":
    key = jax.random.PRNGKey(0)

    # Test 1: aligned spatial (HW multiple of 128), small batch.
    # Test 2: ragged spatial (7x7 -> masked lane stores) + non-divisible batch blocking.
    # Test 3: larger batch exercising multi-step grid / per-core step capping.
    cases = [(2, 4, 16, 16), (3, 8, 7, 7), (9, 8, 16, 16)]

    for idx, (N, C, H, W) in enumerate(cases):
        k_x, k_wc, k_bc, k_ws, k_bs = jax.random.split(jax.random.fold_in(key, idx), 5)
        x = jax.random.normal(k_x, (N, C, H, W), dtype=jnp.float32)

        # Deterministic synthetic HyperZZW parameters (per-channel / scalar).
        wc = jax.random.normal(k_wc, (C, 1), dtype=jnp.float32) * 0.5
        bc = jax.random.normal(k_bc, (C, 1), dtype=jnp.float32) * 0.1
        ws = jax.random.normal(k_ws, (1, 1), dtype=jnp.float32) * 0.5
        bs = jax.random.normal(k_bs, (1, 1), dtype=jnp.float32) * 0.1

        out = hyper_interaction(x, wc, bc, ws, bs)
        out = jax.block_until_ready(out)

        ref = hyper_interaction_reference(x, wc, bc, ws, bs)
        assert out.shape == (N, C, H, W)
        assert jnp.allclose(out, ref, atol=1e-5, rtol=1e-5), f"mismatch vs reference (case {idx})"

    print("KERNEL_OK")
</pallas_src>

<mosaic_0001>
module attributes {stable_mosaic.version = 11 : i64} {
  func.func @_hyper_interaction_kernel(%arg0: i32, %arg1: memref<1x4x256xf32, #tpu.memory_space<vmem>>, %arg2: memref<4x1xf32, #tpu.memory_space<vmem>>, %arg3: memref<4x1xf32, #tpu.memory_space<vmem>>, %arg4: memref<1x1xf32, #tpu.memory_space<smem>>, %arg5: memref<1x1xf32, #tpu.memory_space<smem>>, %arg6: memref<1x4x256xf32, #tpu.memory_space<vmem>>) attributes {dimension_semantics = [#tpu.dimension_semantics<parallel>], iteration_bounds = array<i64: 2>, scalar_prefetch = 0 : i64, scratch_operands = 0 : i64, tpu.core_type = #tpu.core_type<tc>, window_params = [{transform_indices = @transform_0, window_bounds = array<i64: 1, 4, 256>}, {pipeline_mode = #tpu.pipeline_mode<synchronous>, transform_indices = @transform_1, window_bounds = array<i64: 4, 1>}, {pipeline_mode = #tpu.pipeline_mode<synchronous>, transform_indices = @transform_2, window_bounds = array<i64: 4, 1>}, {transform_indices = @transform_3, window_bounds = array<i64: 1, 1>}, {transform_indices = @transform_4, window_bounds = array<i64: 1, 1>}, {transform_indices = @transform_5, window_bounds = array<i64: 1, 4, 256>}]} {
    %c0 = arith.constant 0 : index
    %c0_0 = arith.constant 0 : index
    %c0_1 = arith.constant 0 : index
    %0 = vector.load %arg1[%c0, %c0_0, %c0_1] : memref<1x4x256xf32, #tpu.memory_space<vmem>>, vector<1x4x256xf32>
    %cst = arith.constant dense<0.000000e+00> : vector<1x4xf32>
    %1 = vector.multi_reduction <add>, %0, %cst [2] : vector<1x4x256xf32> to vector<1x4xf32>
    %2 = vector.shape_cast %1 : vector<1x4xf32> to vector<1x4x1xf32>
    %cst_2 = arith.constant 3.906250e-03 : f32
    %3 = vector.broadcast %cst_2 : f32 to vector<1x4x1xf32>
    %4 = arith.mulf %2, %3 : vector<1x4x1xf32>
    %c0_3 = arith.constant 0 : index
    %c0_4 = arith.constant 0 : index
    %5 = vector.load %arg2[%c0_3, %c0_4] : memref<4x1xf32, #tpu.memory_space<vmem>>, vector<4x1xf32>
    %6 = vector.shape_cast %5 : vector<4x1xf32> to vector<1x4x1xf32>
    %c0_5 = arith.constant 0 : index
    %c0_6 = arith.constant 0 : index
    %7 = vector.load %arg3[%c0_5, %c0_6] : memref<4x1xf32, #tpu.memory_space<vmem>>, vector<4x1xf32>
    %8 = vector.shape_cast %7 : vector<4x1xf32> to vector<1x4x1xf32>
    %9 = arith.mulf %6, %4 : vector<1x4x1xf32>
    %10 = arith.addf %9, %8 : vector<1x4x1xf32>
    %11 = arith.mulf %4, %10 : vector<1x4x1xf32>
    %12 = arith.negf %11 : vector<1x4x1xf32>
    %13 = math.exp %12 : vector<1x4x1xf32>
    %cst_7 = arith.constant 1.000000e+00 : f32
    %14 = vector.broadcast %cst_7 : f32 to vector<1x4x1xf32>
    %15 = arith.addf %14, %13 : vector<1x4x1xf32>
    %16 = arith.divf %14, %15 : vector<1x4x1xf32>
    %cst_8 = arith.constant dense<0.000000e+00> : vector<1x256xf32>
    %17 = vector.multi_reduction <add>, %0, %cst_8 [1] : vector<1x4x256xf32> to vector<1x256xf32>
    %18 = vector.shape_cast %17 : vector<1x256xf32> to vector<1x1x256xf32>
    %cst_9 = arith.constant 2.500000e-01 : f32
    %19 = vector.broadcast %cst_9 : f32 to vector<1x1x256xf32>
    %20 = arith.mulf %18, %19 : vector<1x1x256xf32>
    %c0_10 = arith.constant 0 : index
    %c0_11 = arith.constant 0 : index
    %21 = memref.load %arg4[%c0_10, %c0_11] : memref<1x1xf32, #tpu.memory_space<smem>>
    %c0_12 = arith.constant 0 : index
    %c0_13 = arith.constant 0 : index
    %22 = memref.load %arg5[%c0_12, %c0_13] : memref<1x1xf32, #tpu.memory_space<smem>>
    %23 = vector.broadcast %21 : f32 to vector<1x1x256xf32>
    %24 = arith.mulf %23, %20 : vector<1x1x256xf32>
    %25 = vector.broadcast %22 : f32 to vector<1x1x256xf32>
    %26 = arith.addf %24, %25 : vector<1x1x256xf32>
    %27 = arith.mulf %20, %26 : vector<1x1x256xf32>
    %28 = arith.negf %27 : vector<1x1x256xf32>
    %29 = math.exp %28 : vector<1x1x256xf32>
    %cst_14 = arith.constant 1.000000e+00 : f32
    %30 = vector.broadcast %cst_14 : f32 to vector<1x1x256xf32>
    %31 = arith.addf %30, %29 : vector<1x1x256xf32>
    %32 = arith.divf %30, %31 : vector<1x1x256xf32>
    %33 = vector.broadcast %16 : vector<1x4x1xf32> to vector<1x4x256xf32>
    %34 = arith.mulf %0, %33 : vector<1x4x256xf32>
    %35 = vector.broadcast %32 : vector<1x1x256xf32> to vector<1x4x256xf32>
    %36 = arith.mulf %34, %35 : vector<1x4x256xf32>
    %37 = arith.mulf %36, %0 : vector<1x4x256xf32>
    %c0_15 = arith.constant 0 : index
    %c0_16 = arith.constant 0 : index
    %c0_17 = arith.constant 0 : index
    %38 = vector.load %arg6[%c0_15, %c0_16, %c0_17] : memref<1x4x256xf32, #tpu.memory_space<vmem>>, vector<1x4x256xf32>
    tpu.vector_store %arg6[%c0_15, %c0_16, %c0_17], %37 {strides = array<i32>} : memref<1x4x256xf32, #tpu.memory_space<vmem>>, vector<1x4x256xf32>,
    return
  }
  func.func @transform_0(%arg0: i32) -> (i32, i32, i32) {
    %c0_i32 = arith.constant 0 : i32
    %c0_i32_0 = arith.constant 0 : i32
    %c0_i32_1 = arith.constant 0 : i32
    return %arg0, %c0_i32, %c0_i32_0 : i32, i32, i32
  }
  func.func @transform_1(%arg0: i32) -> (i32, i32) {
    %c0_i32 = arith.constant 0 : i32
    %c0_i32_0 = arith.constant 0 : i32
    %c0_i32_1 = arith.constant 0 : i32
    return %c0_i32, %c0_i32_0 : i32, i32
  }
  func.func @transform_2(%arg0: i32) -> (i32, i32) {
    %c0_i32 = arith.constant 0 : i32
    %c0_i32_0 = arith.constant 0 : i32
    %c0_i32_1 = arith.constant 0 : i32
    return %c0_i32, %c0_i32_0 : i32, i32
  }
  func.func @transform_3(%arg0: i32) -> (i32, i32) {
    %c0_i32 = arith.constant 0 : i32
    %c0_i32_0 = arith.constant 0 : i32
    %c0_i32_1 = arith.constant 0 : i32
    return %c0_i32, %c0_i32_0 : i32, i32
  }
  func.func @transform_4(%arg0: i32) -> (i32, i32) {
    %c0_i32 = arith.constant 0 : i32
    %c0_i32_0 = arith.constant 0 : i32
    %c0_i32_1 = arith.constant 0 : i32
    return %c0_i32, %c0_i32_0 : i32, i32
  }
  func.func @transform_5(%arg0: i32) -> (i32, i32, i32) {
    %c0_i32 = arith.constant 0 : i32
    %c0_i32_0 = arith.constant 0 : i32
    %c0_i32_1 = arith.constant 0 : i32
    return %arg0, %c0_i32, %c0_i32_0 : i32, i32, i32
  }
}

</mosaic_0001>

<llo_original>
// kernel: tpu_custom_call.1
$region0: #{tpu_custom_call.1}
  #allocation0 [shape = 'u32[]', space=smem, size = 0x4, offset = 0x4, fixed_abs, tag = 'smem constant byte address 0x4 - core index']
  #allocation1 [shape = 'u32[144,128]{1,0:T(1,128)}', space=vmem, size = 0x12000, scoped, tag = 'internal scratch']
  #allocation2 [shape = 'f32[1,1]{1,0:T(1,128)S(6)}', space=smem, size = 0x200, scoped, tag = 'scoped memory for tpu_custom_call.1']
  #allocation3 [shape = 'f32[1,1]{1,0:T(1,128)S(6)}', space=smem, size = 0x200, scoped, tag = 'scoped memory for tpu_custom_call.1']
  %s0 = inlined_call_operand.vmem [shape: f32[2,4,256], index: 0, kind: input, shape index: {}]
  %s1 = inlined_call_operand.vmem [shape: f32[4,1], index: 1, kind: input, shape index: {}]
  %s2 = inlined_call_operand.vmem [shape: f32[4,1], index: 2, kind: input, shape index: {}]
  %s3 = inlined_call_operand.<no memory space> [shape: f32[1,1], index: 3, kind: input, shape index: {}]
  %s4 = inlined_call_operand.<no memory space> [shape: f32[1,1], index: 4, kind: input, shape index: {}]
  %s5 = inlined_call_operand.hbm [shape: f32[2,4,256], index: 5, kind: output, shape index: {}]
  %s6 = sld [smem:[#allocation0]]
  $region53: #{tpu_custom_call.1} parent=0
    _
  %s8 = ssub.s32 1, %s6
  %s9 = scalar_select 0, %s8, %s6
  %10 = sst [smem:[#allocation2]] %s3
  %11 = sst [smem:[#allocation3]] %s4
  $region1: #{tpu_custom_call.1} parent=0
    #allocation4 [shape = 'u8[8192]{0}', space=vmem, size = 0x2000, scoped, tag = 'output window, operand 0']
    #allocation5 [shape = 's32[2]{0}', space=sflag, size = 0x8, scoped, tag = 'scoped memory for tpu_custom_call.1']
    %12 = vsyncpa [#allocation5], 0
    %s13 = scalar_lea.sflag [#allocation5], 1
    %14 = vsyncpa %s13, 0
    loop: start=0, step=1, limit=4
    $region2: #{tpu_custom_call.1} parent=1 // loop_pre_header
      _
    $region3: #{tpu_custom_call.1} parent=1 // loop_header
      %s16 = sphi 0, %s20
      %p17 = scmp.ge.s32.totalorder %s16, 4
      %s26 = sphi 0, %s28
      %s29 = sphi 0, %s26
      %s30 = sphi 0, %s29
      %s46 = sphi 0, %s30
      %s50 = sphi 0, %s50
      %s52 = sphi 0, %s50
      %s53 = sphi 0, %s52
      %s67 = sphi 0, %s53
      %s71 = sphi 0, %s71
      %s73 = sphi 0, %s71
      %s74 = sphi 0, %s73
      %s88 = sphi 0, %s74
      %s92 = sphi 0, %s92
      %s94 = sphi 0, %s92
      %s95 = sphi 0, %s94
      %s109 = sphi 0, %s95
      %s113 = sphi 0, %s113
      %s115 = sphi 0, %s113
      %s116 = sphi 0, %s115
      %s130 = sphi 0, %s116
      %s136 = sphi 0, %s138
      %s139 = sphi 0, %s136
      %s140 = sphi 0, %s139
      %s156 = sphi 0, %s140
    $region4: #{tpu_custom_call.1} parent=1 // loop_header_branch
      %19 = sbr.rel (%p17) target = $region8
    $region5: #{tpu_custom_call.1} parent=1 // loop_body
      %s21 = ssub.s32 %s16, 1
      %s22 = ssub.s32 %s16, 2
      %s23 = sadd.s32 %s16, 1
      %s24 = ssub.s32 %s16, %s23
      %p25 = scmp.eq.s32.totalorder %s24, 0
      %s27 = sadd.s32 %s26, 1
      %s28 = scalar_select %p25, %s26, %s27
      %p31 = pneg %p25
      %p32 = scmp.eq.s32.totalorder %s16, 1
      %p33 = por %p31, %p32
      %p34 = scmp.ne.s32.totalorder %s26, %s29
      %p35 = scmp.eq.s32.totalorder %s16, 0
      %p36 = por %p34, %p35
      %p37 = scmp.ne.s32.totalorder %s26, %s29
      %p38 = scmp.eq.s32.totalorder %s21, 1
      %p39 = por %p37, %p38
      %p40 = scmp.ne.s32.totalorder %s29, %s30
      %p41 = scmp.eq.s32.totalorder %s21, 0
      %p42 = por %p40, %p41
      %p43 = scmp.ne.s32.totalorder %s29, %s30
      %p44 = scmp.eq.s32.totalorder %s22, 1
      %p45 = por %p43, %p44
      %p47 = scmp.ne.s32.totalorder %s30, %s46
      %p48 = scmp.eq.s32.totalorder %s22, 0
      %p49 = por %p47, %p48
      %s51 = sadd.s32 %s50, 1
      %p54 = scmp.eq.s32.totalorder %s16, 1
      %p55 = scmp.ne.s32.totalorder %s50, %s52
      %p56 = scmp.eq.s32.totalorder %s16, 0
      %p57 = por %p55, %p56
      %p58 = scmp.ne.s32.totalorder %s50, %s52
      %p59 = scmp.eq.s32.totalorder %s21, 1
      %p60 = por %p58, %p59
      %p61 = scmp.ne.s32.totalorder %s52, %s53
      %p62 = scmp.eq.s32.totalorder %s21, 0
      %p63 = por %p61, %p62
      %p64 = scmp.ne.s32.totalorder %s52, %s53
      %p65 = scmp.eq.s32.totalorder %s22, 1
      %p66 = por %p64, %p65
      %p68 = scmp.ne.s32.totalorder %s53, %s67
      %p69 = scmp.eq.s32.totalorder %s22, 0
      %p70 = por %p68, %p69
      %s72 = sadd.s32 %s71, 1
      %p75 = scmp.eq.s32.totalorder %s16, 1
      %p76 = scmp.ne.s32.totalorder %s71, %s73
      %p77 = scmp.eq.s32.totalorder %s16, 0
      %p78 = por %p76, %p77
      %p79 = scmp.ne.s32.totalorder %s71, %s73
      %p80 = scmp.eq.s32.totalorder %s21, 1
      %p81 = por %p79, %p80
      %p82 = scmp.ne.s32.totalorder %s73, %s74
      %p83 = scmp.eq.s32.totalorder %s21, 0
      %p84 = por %p82, %p83
      %p85 = scmp.ne.s32.totalorder %s73, %s74
      %p86 = scmp.eq.s32.totalorder %s22, 1
      %p87 = por %p85, %p86
      %p89 = scmp.ne.s32.totalorder %s74, %s88
      %p90 = scmp.eq.s32.totalorder %s22, 0
      %p91 = por %p89, %p90
      %s93 = sadd.s32 %s92, 1
      %p96 = scmp.eq.s32.totalorder %s16, 1
      %p97 = scmp.ne.s32.totalorder %s92, %s94
      %p98 = scmp.eq.s32.totalorder %s16, 0
      %p99 = por %p97, %p98
      %p100 = scmp.ne.s32.totalorder %s92, %s94
      %p101 = scmp.eq.s32.totalorder %s21, 1
      %p102 = por %p100, %p101
      %p103 = scmp.ne.s32.totalorder %s94, %s95
      %p104 = scmp.eq.s32.totalorder %s21, 0
      %p105 = por %p103, %p104
      %p106 = scmp.ne.s32.totalorder %s94, %s95
      %p107 = scmp.eq.s32.totalorder %s22, 1
      %p108 = por %p106, %p107
      %p110 = scmp.ne.s32.totalorder %s95, %s109
      %p111 = scmp.eq.s32.totalorder %s22, 0
      %p112 = por %p110, %p111
      %s114 = sadd.s32 %s113, 1
      %p117 = scmp.eq.s32.totalorder %s16, 1
      %p118 = scmp.ne.s32.totalorder %s113, %s115
      %p119 = scmp.eq.s32.totalorder %s16, 0
      %p120 = por %p118, %p119
      %p121 = scmp.ne.s32.totalorder %s113, %s115
      %p122 = scmp.eq.s32.totalorder %s21, 1
      %p123 = por %p121, %p122
      %p124 = scmp.ne.s32.totalorder %s115, %s116
      %p125 = scmp.eq.s32.totalorder %s21, 0
      %p126 = por %p124, %p125
      %p127 = scmp.ne.s32.totalorder %s115, %s116
      %p128 = scmp.eq.s32.totalorder %s22, 1
      %p129 = por %p127, %p128
      %p131 = scmp.ne.s32.totalorder %s116, %s130
      %p132 = scmp.eq.s32.totalorder %s22, 0
      %p133 = por %p131, %p132
      %s134 = ssub.s32 %s16, %s23
      %p135 = scmp.eq.s32.totalorder %s134, 0
      %s137 = sadd.s32 %s136, 1
      %s138 = scalar_select %p135, %s136, %s137
      %p141 = pneg %p135
      %p142 = scmp.eq.s32.totalorder %s16, 1
      %p143 = por %p141, %p142
      %p144 = scmp.ne.s32.totalorder %s136, %s139
      %p145 = scmp.eq.s32.totalorder %s16, 0
      %p146 = por %p144, %p145
      %p147 = scmp.ne.s32.totalorder %s136, %s139
      %p148 = scmp.eq.s32.totalorder %s21, 1
      %p149 = por %p147, %p148
      %p150 = scmp.ne.s32.totalorder %s139, %s140
      %p151 = scmp.eq.s32.totalorder %s21, 0
      %p152 = por %p150, %p151
      %p153 = scmp.ne.s32.totalorder %s139, %s140
      %p154 = scmp.eq.s32.totalorder %s22, 1
      %p155 = por %p153, %p154
      %p157 = scmp.ne.s32.totalorder %s140, %s156
      %p158 = scmp.eq.s32.totalorder %s22, 0
      %p159 = por %p157, %p158
      %p160 = scmp.le.s32.totalorder 1, %s16
      %p161 = scmp.lt.s32.totalorder %s16, 3
      %p162 = pnand %p160, %p161
      %p163 = pneg %p162
      // Predicated region
      $region9: #{tpu_custom_call.1} parent=5 // pred_check
        _
      $region10: #{tpu_custom_call.1} parent=5 // pred_check_branch
        %165 = sbr.rel (%p162) target = $region12
      $region11: #{tpu_custom_call.1} parent=5 // pred_region
        %s166 = ssub.s32 %s16, 1
        // Predicated region
        $region13: #{tpu_custom_call.1} parent=11 // pred_check
          %p167 = pneg %p63
        $region14: #{tpu_custom_call.1} parent=11 // pred_check_branch
          %169 = sbr.rel (%p167) target = $region16
        $region15: #{tpu_custom_call.1} parent=11 // pred_region
          _
        $region16: #{tpu_custom_call.1} parent=11 // pred_fallthru
          _
        // Predicated region
        $region17: #{tpu_custom_call.1} parent=11 // pred_check
          %p170 = pneg %p84
        $region18: #{tpu_custom_call.1} parent=11 // pred_check_branch
          %172 = sbr.rel (%p170) target = $region20
        $region19: #{tpu_custom_call.1} parent=11 // pred_region
          _
        $region20: #{tpu_custom_call.1} parent=11 // pred_fallthru
          _
        // Predicated region
        $region21: #{tpu_custom_call.1} parent=11 // pred_check
          %p173 = pneg %p105
        $region22: #{tpu_custom_call.1} parent=11 // pred_check_branch
          %175 = sbr.rel (%p173) target = $region24
        $region23: #{tpu_custom_call.1} parent=11 // pred_region
          _
        $region24: #{tpu_custom_call.1} parent=11 // pred_fallthru
          _
        // Predicated region
        $region25: #{tpu_custom_call.1} parent=11 // pred_check
          %p176 = pneg %p126
        $region26: #{tpu_custom_call.1} parent=11 // pred_check_branch
          %178 = sbr.rel (%p176) target = $region28
        $region27: #{tpu_custom_call.1} parent=11 // pred_region
          _
        $region28: #{tpu_custom_call.1} parent=11 // pred_fallthru
          _
      $region12: #{tpu_custom_call.1} parent=5 // pred_fallthru
        _
      %p179 = scmp.lt.s32.totalorder %s16, 2
      // Predicated region
      $region29: #{tpu_custom_call.1} parent=5 // pred_check
        %p180 = pneg %p179
      $region30: #{tpu_custom_call.1} parent=5 // pred_check_branch
        %182 = sbr.rel (%p180) target = $region32
      $region31: #{tpu_custom_call.1} parent=5 // pred_region
        // Predicated region
        $region33: #{tpu_custom_call.1} parent=31 // pred_check
          %p183 = pneg %p36
        $region34: #{tpu_custom_call.1} parent=31 // pred_check_branch
          %185 = sbr.rel (%p183) target = $region36
        $region35: #{tpu_custom_call.1} parent=31 // pred_region
          %p186 = scmp.lt.s32.totalorder %s16, 1
          %s187 = scalar_select %p186, %s16, 1
          %s188 = smul.addr %s187, 2
          %s189 = smul.addr %s188, 4
          %s190 = scalar_lea.vmem %s0, %s189
        $region36: #{tpu_custom_call.1} parent=31 // pred_fallthru
          _
      $region32: #{tpu_custom_call.1} parent=5 // pred_fallthru
        _
      %p191 = scmp.le.s32.totalorder 1, %s16
      %p192 = scmp.lt.s32.totalorder %s16, 3
      %p193 = pnand %p191, %p192
      %p194 = pneg %p193
      // Predicated region
      $region37: #{tpu_custom_call.1} parent=5 // pred_check
        _
      $region38: #{tpu_custom_call.1} parent=5 // pred_check_branch
        %196 = sbr.rel (%p193) target = $region40
      $region39: #{tpu_custom_call.1} parent=5 // pred_region
        %s197 = ssub.s32 %s16, 1
        %p198 = scmp.lt.s32.totalorder %s21, 1
        %s199 = scalar_select %p198, %s21, 1
        %s200 = smul.addr %s199, 2
        %s201 = smul.addr %s200, 4
        %s202 = scalar_lea.vmem %s0, %s201
        %p203 = pneg %p42
        %p204 = pneg %p39
        %p205 = pneg %p63
        %p206 = pneg %p60
        %p207 = pneg %p84
        %p208 = pneg %p81
        %p209 = pneg %p105
        %p210 = pneg %p102
        %p211 = pneg %p126
        %p212 = pneg %p123
        %p213 = pneg %p152
        %p214 = pneg %p149
        %s215 = sand.u32 %s139, 1
        %s216 = scalar_lea.sflag [#allocation5], %s215
        %s217 = sand.u32 %s139, 1
        %s218 = smul.addr %s217, 8
        %s219 = scalar_lea.vmem [#allocation4], %s218
        %p220 = scmp.lt.s32.totalorder %s21, 1
        %s221 = scalar_select %p220, %s21, 1
        %s222 = smul.addr %s221, 2
        %s223 = smul.addr %s222, 4
        %s224 = scalar_lea.vmem %s0, %s223
        %v225 = vld [vmem:[%s224] sm:$0xff]
        %v227 = vcombine.high %v225, %v225
        %vm229 = vcmask 1043456
        %v230 = vsel %vm229, %v225, 0.0
        %v231 = vsel %vm229, %v227, 0.0
        %v232 = vadd.f32 %v230, %v231
        %233 = vadd.xlane.f32.xlu0 %v232
        %v234 = vpop.xlane.xlu0 %233
        %v235 = vmul.f32 %v234, 0.00390625
        %v236 = vld [vmem:[%s1] sm:$0xf]
        %v237 = vld [vmem:[%s2] sm:$0xf]
        %v238 = vmul.f32 %v236, %v235
        %v239 = vadd.f32 %v238, %v237
        %v240 = vmul.f32 %v235, %v239
        %v241 = vxor.u32 %v240, 2147483648
        %v242 = vmul.f32 %v241, 1.442695
        %v243 = vpow.pop %v242
        %v244 = vadd.f32 %v243, 1.0
        %v245 = vrcp.pop %v244
        %v246 = vmul.f32 1.0, %v245
        %v247 = vrot.slane %v230, 4
        %v248 = vadd.f32 %v230, %v247
        %v249 = vrot.slane %v248, 2
        %v250 = vadd.f32 %v248, %v249
        %v251 = vrot.slane %v250, 1
        %v252 = vadd.f32 %v250, %v251
        %v253 = vrot.slane %v231, 4
        %v254 = vadd.f32 %v231, %v253
        %v255 = vrot.slane %v254, 2
        %v256 = vadd.f32 %v254, %v255
        %v257 = vrot.slane %v256, 1
        %v258 = vadd.f32 %v256, %v257
        %v259 = vmul.f32 %v252, 0.25
        %v260 = vmul.f32 %v258, 0.25
        %s261 = sld [smem:[#allocation2]]
        %s262 = sld [smem:[#allocation3]]
        %v263 = vstv %s261
        %v264 = vmul.f32 %v263, %v259
        %v265 = vmul.f32 %v263, %v260
        %v266 = vstv %s262
        %v267 = vadd.f32 %v264, %v266
        %v268 = vadd.f32 %v265, %v266
        %v269 = vmul.f32 %v259, %v267
        %v270 = vmul.f32 %v260, %v268
        %v271 = vxor.u32 %v269, 2147483648
        %v272 = vxor.u32 %v270, 2147483648
        %v273 = vmul.f32 %v271, 1.442695
        %v274 = vpow.pop %v273
        %v275 = vmul.f32 %v272, 1.442695
        %v276 = vpow.pop %v275
        %v277 = vadd.f32 %v274, 1.0
        %v278 = vadd.f32 %v276, 1.0
        %v279 = vrcp.pop %v277
        %v280 = vmul.f32 1.0, %v279
        %v281 = vrcp.pop %v278
        %v282 = vmul.f32 1.0, %v281
        %284 = vset.pattern.permute.xlu0 0
        %285 = vperm.xlu0 %284, %v246
        %v286 = vpop.permute.xlu0 %285
        %v288 = vunpack.c.l.s4 839922192
        %v289 = vunpack.c.0.s8 %v288
        %v290 = vlaneseq
        %v291 = vshrl.u32 %v290, 7
        %v292 = vsub.s32 %v289, %v291
        %v293 = vrot.slane %v286, %v292
        %v295 = vmul.f32 %v225, %v293
        %v298 = vcombine.low %v280, %v282
        %v300 = vmul.f32 %v295, %v298
        %v301 = vmul.f32 %v300, %v225
        %302 = vst [vmem:[%s219] sm:$0xff] %v301
        %s303 = sand.u32 %s139, 1
        %s304 = scalar_lea.sflag [#allocation5], %s303
        %s305 = sand.u32 %s139, 1
        %s306 = smul.addr %s305, 8
        %s307 = scalar_lea.vmem [#allocation4], %s306
        // Predicated region
        $region41: #{tpu_custom_call.1} parent=39 // pred_check
          %p308 = pneg %p149
        $region42: #{tpu_custom_call.1} parent=39 // pred_check_branch
          %310 = sbr.rel (%p308) target = $region44
        $region43: #{tpu_custom_call.1} parent=39 // pred_region
          %s312 = ssub.s32 128, 128
          %313 = vsyncadd %s304, %s312
          %s314 = smul.addr %s21, 2
          %s315 = smul.addr %s314, 64
          %s316 = scalar_lea.hbm %s5, %s315
          %s318 = sshll.u32 %s307, 4
          %s319 = int_to_ptr.vmem [resolvable:$true] %s318
          %321 = dma.vmem_to_hbm [thread:$0]  %s319, 128, %s316, %s304
        $region44: #{tpu_custom_call.1} parent=39 // pred_fallthru
          _
      $region40: #{tpu_custom_call.1} parent=5 // pred_fallthru
        _
      %p322 = scmp.le.s32.totalorder 2, %s16
      // Predicated region
      $region45: #{tpu_custom_call.1} parent=5 // pred_check
        %p323 = pneg %p322
      $region46: #{tpu_custom_call.1} parent=5 // pred_check_branch
        %325 = sbr.rel (%p323) target = $region48
      $region47: #{tpu_custom_call.1} parent=5 // pred_region
        %s326 = ssub.s32 %s16, 2
        // Predicated region
        $region49: #{tpu_custom_call.1} parent=47 // pred_check
          %p327 = pneg %p155
        $region50: #{tpu_custom_call.1} parent=47 // pred_check_branch
          %329 = sbr.rel (%p327) target = $region52
        $region51: #{tpu_custom_call.1} parent=47 // pred_region
          %s330 = sand.u32 %s140, 1
          %s331 = scalar_lea.sflag [#allocation5], %s330
          %s332 = sand.u32 %s140, 1
          %s333 = smul.addr %s332, 8
          %s334 = scalar_lea.vmem [#allocation4], %s333
          %335 = dma.done %s331, 128
        $region52: #{tpu_custom_call.1} parent=47 // pred_fallthru
          _
      $region48: #{tpu_custom_call.1} parent=5 // pred_fallthru
        _
    $region6: #{tpu_custom_call.1} parent=1 // loop_footer
      %s20 = sadd.s32 1, %s16
    $region7: #{tpu_custom_call.1} parent=1 // loop_footer_branch
      %15 = sbr.rel target = $region3
    $region8: #{tpu_custom_call.1} parent=1 // loop_exit
      _
    %336 = vsyncpa [#allocation5], 1
    %s337 = scalar_lea.sflag [#allocation5], 1
    %338 = vsyncpa %s337, 1

</llo_original>
